<compile_context>
chip_gen: v7x
topology: tpu7x:2x2x1
jax: 0.10.0
libtpu: 0.0.40
codegen_flags: <defaults>
</compile_context>

<pallas_src>
import math

import jax
import jax.numpy as jnp
from jax.experimental import pallas as pl
from jax.experimental.pallas import tpu as pltpu

_LANES = 128
_LOG2 = math.log(2.0)
_SINGLE_BLOCK_BYTES = 2 << 20          # whole-array path for small unaligned inputs
_PER_STREAM_BLOCK_BYTES_CAP = 4 << 20  # ~4 MiB/stream; (2in+1out) x 2 bufs ~= 24 MiB


def _vmem_capacity_bytes() -> int:
    try:
        return int(pltpu.get_tpu_info().vmem_capacity_bytes)
    except Exception:
        return 64 << 20  # conservative: v7x per-TC VMEM


def _sublane_multiple(dtype) -> int:
    itemsize = jnp.dtype(dtype).itemsize
    return 8 * max(1, 4 // itemsize)  # f32 -> 8, bf16 -> 16, int8/fp8 -> 32


def _per_stream_block_bytes() -> int:
    vmem = _vmem_capacity_bytes()
    # Keep (2 in + 1 out) x double-buffer <= ~3/8 of physical VMEM.
    return max(512 << 10, min(_PER_STREAM_BLOCK_BYTES_CAP, (vmem * 3 // 8) // 6))


def _make_kernel(eps: float, compute_dtype):
    def kernel(yp_ref, yt_ref, o_ref):
        z = yp_ref[...].astype(compute_dtype) - yt_ref[...].astype(compute_dtype) + eps
        a = jnp.abs(z)
        o_ref[...] = (a + jnp.log1p(jnp.exp(-2.0 * a)) - _LOG2).astype(o_ref.dtype)
    return kernel


def _logcosh_jnp(yp, yt, eps, compute_dtype, out_dtype):
    z = yp.astype(compute_dtype) - yt.astype(compute_dtype) + eps
    a = jnp.abs(z)
    return (a + jnp.log1p(jnp.exp(-2.0 * a)) - _LOG2).astype(out_dtype)


def _cost(n, itemsize):
    return pl.CostEstimate(flops=6 * n, transcendentals=2 * n,
                           bytes_accessed=3 * n * itemsize)


def _run_blocked_2d(kernel, yp2d, yt2d, dtype, vmem_limit):
    rows = yp2d.shape[0]
    itemsize = jnp.dtype(dtype).itemsize
    cap = _per_stream_block_bytes() // (_LANES * itemsize)
    sub = _sublane_multiple(dtype)
    cap = max(sub, (cap // sub) * sub)
    tile_rows = rows if rows <= cap else cap  # full-extent block is always legal
    grid = (pl.cdiv(rows, tile_rows),)
    spec = pl.BlockSpec((tile_rows, _LANES), lambda i: (i, 0))
    return pl.pallas_call(
        kernel,
        out_shape=jax.ShapeDtypeStruct((rows, _LANES), dtype),
        grid_spec=pltpu.PrefetchScalarGridSpec(
            num_scalar_prefetch=0,
            grid=grid,
            in_specs=[spec, spec],
            out_specs=spec,
        ),
        compiler_params=pltpu.CompilerParams(
            dimension_semantics=("parallel",),
            vmem_limit_bytes=vmem_limit,
        ),
        cost_estimate=_cost(rows * _LANES, itemsize),
    )(yp2d, yt2d)


def log_cosh_errors(y_pred, y_true, *, softplus=True, eps=None):
    """Elementwise log(cosh(y_pred - y_true (+ eps))) as a Pallas TPU kernel."""
    assert y_pred.shape == y_true.shape, "shapes must match (no broadcasting needed)"
    orig_shape = y_pred.shape
    dtype = jnp.result_type(y_pred.dtype, y_true.dtype)
    if not jnp.issubdtype(dtype, jnp.floating):
        dtype = jnp.float32  # integer inputs: promote instead of truncating
    y_pred = y_pred.astype(dtype)
    y_true = y_true.astype(dtype)

    n = math.prod(orig_shape)
    if n == 0:
        return jnp.zeros(orig_shape, dtype)

    if softplus:
        eps_val = 0.0
    else:
        # Torch: `eps = self.eps or torch.finfo(x.dtype).eps` -> None/0.0 falls
        # back to the *input* dtype's eps (module semantics preserved).
        eps_val = float(eps) if eps else float(jnp.finfo(dtype).eps)

    itemsize = jnp.dtype(dtype).itemsize
    compute_dtype = jnp.float32 if itemsize < 4 else dtype
    kernel = _make_kernel(eps_val, compute_dtype)

    vmem = _vmem_capacity_bytes()
    vmem_limit = int(min(vmem * 3 // 4, 64 << 20))

    yp_flat = y_pred.reshape(-1)
    yt_flat = y_true.reshape(-1)
    n_tail = n % _LANES

    if n_tail == 0:
        # Common case: free reshape to a lane-dense slab, zero extra HBM traffic.
        rows = n // _LANES
        out = _run_blocked_2d(kernel, yp_flat.reshape(rows, _LANES),
                              yt_flat.reshape(rows, _LANES), dtype, vmem_limit)
        return out.reshape(orig_shape)

    if n * itemsize <= _SINGLE_BLOCK_BYTES:
        # Small unaligned input: whole flat array as one VMEM block (no grid, no pad).
        out = pl.pallas_call(
            kernel,
            out_shape=jax.ShapeDtypeStruct((n,), dtype),
            compiler_params=pltpu.CompilerParams(vmem_limit_bytes=vmem_limit),
            cost_estimate=_cost(n, itemsize),
        )(yp_flat, yt_flat)
        return out.reshape(orig_shape)

    # Large & unaligned (rare): 128-aligned prefix through the blocked kernel,
    # <128-element tail in plain jnp, then stitch.
    n_main = n - n_tail
    rows = n_main // _LANES
    out_main = _run_blocked_2d(kernel,
                               yp_flat[:n_main].reshape(rows, _LANES),
                               yt_flat[:n_main].reshape(rows, _LANES),
                               dtype, vmem_limit)
    out_tail = _logcosh_jnp(yp_flat[n_main:], yt_flat[n_main:],
                            eps_val, compute_dtype, dtype)
    return jnp.concatenate([out_main.reshape(-1), out_tail]).reshape(orig_shape)


def _ref_log_cosh(y_pred, y_true, *, softplus=True, eps=None):
    """Pure-JAX reference (f32 math), independent formulation for the softplus path."""
    in_dtype = jnp.result_type(y_pred.dtype, y_true.dtype)
    x = y_pred.astype(jnp.float32) - y_true.astype(jnp.float32)
    if softplus:
        return x + jax.nn.softplus(-2.0 * x) - _LOG2
    e = float(eps) if eps else float(jnp.finfo(in_dtype).eps)
    z = x + e
    a = jnp.abs(z)
    return a + jnp.log1p(jnp.exp(-2.0 * a)) - _LOG2


if __name__ == "__main__":
    key = jax.random.PRNGKey(0)
    k1, k2, k3, k4 = jax.random.split(key, 4)

    # NCHW-shaped example, 128-aligned -> lane-dense blocked path.
    shape = (2, 4, 16, 16)
    y_pred = jax.random.normal(k1, shape, dtype=jnp.float32)
    y_true = jax.random.normal(k2, shape, dtype=jnp.float32)

    out_sp = jax.block_until_ready(log_cosh_errors(y_pred, y_true, softplus=True))
    out_eps = jax.block_until_ready(log_cosh_errors(y_pred, y_true, softplus=False))
    ref_sp = _ref_log_cosh(y_pred, y_true, softplus=True)
    ref_eps = _ref_log_cosh(y_pred, y_true, softplus=False)
    assert out_sp.shape == shape and out_eps.shape == shape
    assert jnp.allclose(out_sp, ref_sp, atol=1e-5, rtol=1e-5)
    assert jnp.allclose(out_eps, ref_eps, atol=1e-5, rtol=1e-5)

    # bf16 inputs -> f32 intermediates inside the kernel, bf16 store.
    yp_bf = y_pred.astype(jnp.bfloat16)
    yt_bf = y_true.astype(jnp.bfloat16)
    out_bf = jax.block_until_ready(log_cosh_errors(yp_bf, yt_bf, softplus=True))
    ref_bf = _ref_log_cosh(yp_bf, yt_bf, softplus=True)
    assert out_bf.dtype == jnp.bfloat16
    assert jnp.allclose(out_bf.astype(jnp.float32), ref_bf, atol=5e-2, rtol=5e-2)

    # Unaligned shape (n % 128 != 0) -> whole-array single-block path, no padding.
    shape2 = (3, 5, 7)
    yp2 = 10.0 * jax.random.normal(k3, shape2, dtype=jnp.float32)
    yt2 = 10.0 * jax.random.normal(k4, shape2, dtype=jnp.float32)
    out2 = jax.block_until_ready(log_cosh_errors(yp2, yt2, softplus=False, eps=1e-6))
    ref2 = _ref_log_cosh(yp2, yt2, softplus=False, eps=1e-6)
    assert out2.shape == shape2
    assert jnp.allclose(out2, ref2, atol=1e-5, rtol=1e-5)

    print("KERNEL_OK")
</pallas_src>

<mosaic_0001>
module attributes {stable_mosaic.version = 11 : i64} {
  func.func @kernel(%arg0: i32, %arg1: memref<16x128xf32, #tpu.memory_space<vmem>>, %arg2: memref<16x128xf32, #tpu.memory_space<vmem>>, %arg3: memref<16x128xf32, #tpu.memory_space<vmem>>) attributes {dimension_semantics = [#tpu.dimension_semantics<parallel>], iteration_bounds = array<i64: 1>, scalar_prefetch = 0 : i64, scratch_operands = 0 : i64, tpu.core_type = #tpu.core_type<tc>, window_params = [{transform_indices = @transform_0, window_bounds = array<i64: 16, 128>}, {transform_indices = @transform_1, window_bounds = array<i64: 16, 128>}, {transform_indices = @transform_2, window_bounds = array<i64: 16, 128>}]} {
    %c0 = arith.constant 0 : index
    %c0_0 = arith.constant 0 : index
    %0 = vector.load %arg1[%c0, %c0_0] : memref<16x128xf32, #tpu.memory_space<vmem>>, vector<16x128xf32>
    %c0_1 = arith.constant 0 : index
    %c0_2 = arith.constant 0 : index
    %1 = vector.load %arg2[%c0_1, %c0_2] : memref<16x128xf32, #tpu.memory_space<vmem>>, vector<16x128xf32>
    %2 = arith.subf %0, %1 : vector<16x128xf32>
    %cst = arith.constant 0.000000e+00 : f32
    %3 = vector.broadcast %cst : f32 to vector<16x128xf32>
    %4 = arith.addf %2, %3 : vector<16x128xf32>
    %5 = math.absf %4 : vector<16x128xf32>
    %cst_3 = arith.constant -2.000000e+00 : f32
    %6 = vector.broadcast %cst_3 : f32 to vector<16x128xf32>
    %7 = arith.mulf %6, %5 : vector<16x128xf32>
    %8 = math.exp %7 : vector<16x128xf32>
    %9 = math.log1p %8 : vector<16x128xf32>
    %10 = arith.addf %5, %9 : vector<16x128xf32>
    %cst_4 = arith.constant 0.693147182 : f32
    %11 = vector.broadcast %cst_4 : f32 to vector<16x128xf32>
    %12 = arith.subf %10, %11 : vector<16x128xf32>
    %c0_5 = arith.constant 0 : index
    %c0_6 = arith.constant 0 : index
    %13 = vector.load %arg3[%c0_5, %c0_6] : memref<16x128xf32, #tpu.memory_space<vmem>>, vector<16x128xf32>
    tpu.vector_store %arg3[%c0_5, %c0_6], %12 {strides = array<i32>} : memref<16x128xf32, #tpu.memory_space<vmem>>, vector<16x128xf32>,
    return
  }
  func.func @transform_0(%arg0: i32) -> (i32, i32) {
    %c0_i32 = arith.constant 0 : i32
    %c0_i32_0 = arith.constant 0 : i32
    return %arg0, %c0_i32 : i32, i32
  }
  func.func @transform_1(%arg0: i32) -> (i32, i32) {
    %c0_i32 = arith.constant 0 : i32
    %c0_i32_0 = arith.constant 0 : i32
    return %arg0, %c0_i32 : i32, i32
  }
  func.func @transform_2(%arg0: i32) -> (i32, i32) {
    %c0_i32 = arith.constant 0 : i32
    %c0_i32_0 = arith.constant 0 : i32
    return %arg0, %c0_i32 : i32, i32
  }
}

</mosaic_0001>

<llo_original>
// kernel: tpu_custom_call.1
$region0: #{tpu_custom_call.1}
  #allocation0 [shape = 'u32[]', space=smem, size = 0x4, offset = 0x4, fixed_abs, tag = 'smem constant byte address 0x4 - core index']
  #allocation1 [shape = 'u32[144,128]{1,0:T(1,128)}', space=vmem, size = 0x12000, scoped, tag = 'internal scratch']
  %s0 = inlined_call_operand.hbm [shape: f32[16,128], index: 0, kind: input, shape index: {}]
  %s1 = inlined_call_operand.hbm [shape: f32[16,128], index: 1, kind: input, shape index: {}]
  %s2 = inlined_call_operand.hbm [shape: f32[16,128], index: 2, kind: output, shape index: {}]
  %s3 = sld [smem:[#allocation0]]
  $region26: #{tpu_custom_call.1} parent=0
    _
  %s5 = ssub.s32 1, %s3
  %s6 = scalar_select 0, %s5, %s3
  $region1: #{tpu_custom_call.1} parent=0
    #allocation2 [shape = 'u8[8192]{0}', space=vmem, size = 0x2000, scoped, tag = 'input window, operand 0, single buffered']
    #allocation3 [shape = 's32[1]{0}', space=sflag, size = 0x4, scoped, tag = 'scoped memory for tpu_custom_call.1']
    #allocation4 [shape = 's32[1]{0}', space=sflag, size = 0x4, scoped, tag = 'scoped memory for tpu_custom_call.1']
    #allocation5 [shape = 'u8[8192]{0}', space=vmem, size = 0x2000, scoped, tag = 'input window, operand 1, single buffered']
    #allocation6 [shape = 's32[1]{0}', space=sflag, size = 0x4, scoped, tag = 'scoped memory for tpu_custom_call.1']
    #allocation7 [shape = 'u8[8192]{0}', space=vmem, size = 0x2000, scoped, tag = 'output window, operand 0, single buffered']
    %7 = vsyncpa [#allocation3], 0
    %8 = vsyncpa [#allocation6], 0
    %9 = vsyncpa [#allocation4], 0
    // Predicated region
    $region2: #{tpu_custom_call.1} parent=1 // pred_check
      _
    $region3: #{tpu_custom_call.1} parent=1 // pred_check_branch
      %11 = sbr.rel (0) target = $region5
    $region4: #{tpu_custom_call.1} parent=1 // pred_region
      %s13 = ssub.s32 256, 256
      %14 = vsyncadd [#allocation3], %s13
      %s15 = sshll.u32 [#allocation2], 4
      %s16 = int_to_ptr.vmem [resolvable:$true] %s15
      %21 = dma.hbm_to_vmem [thread:$0]  %s0, 256, %s16, [#allocation3], 128, 128, 8
    $region5: #{tpu_custom_call.1} parent=1 // pred_fallthru
      _
    // Predicated region
    $region6: #{tpu_custom_call.1} parent=1 // pred_check
      _
    $region7: #{tpu_custom_call.1} parent=1 // pred_check_branch
      %23 = sbr.rel (0) target = $region9
    $region8: #{tpu_custom_call.1} parent=1 // pred_region
      %s25 = ssub.s32 256, 256
      %26 = vsyncadd [#allocation6], %s25
      %s27 = sshll.u32 [#allocation5], 4
      %s28 = int_to_ptr.vmem [resolvable:$true] %s27
      %33 = dma.hbm_to_vmem [thread:$0]  %s1, 256, %s28, [#allocation6], 128, 128, 8
    $region9: #{tpu_custom_call.1} parent=1 // pred_fallthru
      _
    // Predicated region
    $region10: #{tpu_custom_call.1} parent=1 // pred_check
      _
    $region11: #{tpu_custom_call.1} parent=1 // pred_check_branch
      %35 = sbr.rel (0) target = $region13
    $region12: #{tpu_custom_call.1} parent=1 // pred_region
      %36 = dma.done [#allocation3], 256
    $region13: #{tpu_custom_call.1} parent=1 // pred_fallthru
      _
    // Predicated region
    $region14: #{tpu_custom_call.1} parent=1 // pred_check
      _
    $region15: #{tpu_custom_call.1} parent=1 // pred_check_branch
      %38 = sbr.rel (0) target = $region17
    $region16: #{tpu_custom_call.1} parent=1 // pred_region
      %39 = dma.done [#allocation6], 256
    $region17: #{tpu_custom_call.1} parent=1 // pred_fallthru
      _
    %v40 = vld [vmem:[#allocation2] sm:$0xff]
    %v41 = vld [vmem:[#allocation2 + $0x8] sm:$0xff]
    %v42 = vld [vmem:[#allocation5] sm:$0xff]
    %v43 = vld [vmem:[#allocation5 + $0x8] sm:$0xff]
    %v44 = vsub.f32 %v40, %v42
    %v45 = vsub.f32 %v41, %v43
    %v46 = vadd.f32 %v44, 0.0
    %v47 = vadd.f32 %v45, 0.0
    %v48 = vand.u32 2147483647, %v46
    %v49 = vand.u32 2147483647, %v47
    %v50 = vmul.f32 %v48, -2.0
    %v51 = vmul.f32 %v49, -2.0
    %v52 = vmul.f32 %v50, 1.442695
    %v53 = vpow.pop %v52
    %v54 = vmul.f32 %v51, 1.442695
    %v55 = vpow.pop %v54
    %v56 = vadd.f32 %v53, 1.0
    %v57 = vlog2.pop %v56
    %v58 = vmul.f32 %v57, 0.6931472
    %v59 = vmul.f32 -0.5, %v53
    %v60 = vadd.f32 %v59, 1.0
    %v61 = vmul.f32 %v60, %v53
    %v62 = vand.u32 2147483647, %v53
    %vm63 = vcmp.lt.f32.partialorder %v62, 0.0004427343
    %v64 = vsel %vm63, %v61, %v58
    %v65 = vadd.f32 %v55, 1.0
    %v66 = vlog2.pop %v65
    %v67 = vmul.f32 %v66, 0.6931472
    %v68 = vmul.f32 -0.5, %v55
    %v69 = vadd.f32 %v68, 1.0
    %v70 = vmul.f32 %v69, %v55
    %v71 = vand.u32 2147483647, %v55
    %vm72 = vcmp.lt.f32.partialorder %v71, 0.0004427343
    %v73 = vsel %vm72, %v70, %v67
    %v74 = vadd.f32 %v48, %v64
    %v75 = vadd.f32 %v49, %v73
    %v76 = vsub.f32 %v74, 0.6931472
    %v77 = vsub.f32 %v75, 0.6931472
    %78 = vst [vmem:[#allocation7] sm:$0xff] %v76
    %79 = vst [vmem:[#allocation7 + $0x8] sm:$0xff] %v77
    // Predicated region
    $region18: #{tpu_custom_call.1} parent=1 // pred_check
      _
    $region19: #{tpu_custom_call.1} parent=1 // pred_check_branch
      %81 = sbr.rel (0) target = $region21
    $region20: #{tpu_custom_call.1} parent=1 // pred_region
      %s83 = ssub.s32 256, 256
      %84 = vsyncadd [#allocation4], %s83
      %s85 = sshll.u32 [#allocation7], 4
      %s86 = int_to_ptr.vmem [resolvable:$true] %s85
      %91 = dma.vmem_to_hbm [thread:$0]  %s86, 256, %s2, [#allocation4], 128, 128, 8
    $region21: #{tpu_custom_call.1} parent=1 // pred_fallthru
      _
    // Predicated region
    $region22: #{tpu_custom_call.1} parent=1 // pred_check
      _
    $region23: #{tpu_custom_call.1} parent=1 // pred_check_branch
      %93 = sbr.rel (0) target = $region25
    $region24: #{tpu_custom_call.1} parent=1 // pred_region
      %94 = dma.done [#allocation4], 256
    $region25: #{tpu_custom_call.1} parent=1 // pred_fallthru
      _
    %95 = vsyncpa [#allocation3], 1
    %96 = vsyncpa [#allocation6], 1
    %97 = vsyncpa [#allocation4], 1

</llo_original>
